<compile_context>
chip_gen: v5e
topology: v5e:2x2
jax: 0.10.0
libtpu: 0.0.40
codegen_flags: <defaults>
</compile_context>

<pallas_src>
import functools

import jax
import jax.numpy as jnp
import numpy as np
from jax import lax
from jax.experimental import pallas as pl
from jax.experimental.pallas import tpu as pltpu


# ---------------------------------------------------------------------------
# Fused Pallas kernel
# ---------------------------------------------------------------------------

def _ac_fused_kernel(img_ref, mem_ref, wA_ref, wL_ref, b_ref,
                     misc_ref, memout_ref, p1_scr, p2_scr, *, n_act):
    """Entire ACModel forward for a (padded) batch, fully VMEM resident.

    img_ref:  (Bp, 160)   image slab, lane = row*21 + col*3 + chan (zero padded)
    mem_ref:  (Bp, 128)   [h | c]
    wA_ref:   (512, 128)  packed weights: conv1 / conv2 / conv3 / head1 / head2
    wL_ref:   (128, 256)  fused LSTM weight for [x | h] -> (i,f,g,o) gates
    b_ref:    (8, 256)    packed biases (one row per layer)
    misc_ref: (Bp, 128)   [log_probs (n_act) | value (1) | zeros]
    memout_ref: (Bp, 128) [h_new | c_new]   (aliased with mem input)
    p1_scr:   (6*Bp, 48)  conv1 patch scratch (row-block i = image lanes 21i..21i+48)
    p2_scr:   (Bp, 144)   conv2 patch scratch (9 pooled positions x 16 channels)
    """
    Bp = mem_ref.shape[0]
    H = 64

    def mm(a, b):
        return jnp.dot(a, b, preferred_element_type=jnp.float32)

    def sigmoid(z):
        # exact, single EUP op
        return 0.5 * jnp.tanh(0.5 * z) + 0.5

    # ---- conv1: 2x2, 3->16 on 7x7 -> 6x6 (one matmul, im2col in the weight) ---
    for i in range(6):
        p1_scr[i * Bp:(i + 1) * Bp, :] = img_ref[:, 21 * i:21 * i + 48]
    # (6Bp,48) @ (48,96): column block j holds the 16 channels of output col j
    y1 = jnp.maximum(mm(p1_scr[...], wA_ref[0:48, 0:96]) + b_ref[0:1, 0:96], 0.0)

    # ---- maxpool 2x2 stride 2: 6x6x16 -> 3x3x16, written in conv2 patch order --
    for pi in range(3):
        for pj in range(3):
            r0 = (2 * pi) * Bp
            r1 = (2 * pi + 1) * Bp
            c0 = (2 * pj) * 16
            c1 = (2 * pj + 1) * 16
            m = jnp.maximum(
                jnp.maximum(y1[r0:r0 + Bp, c0:c0 + 16], y1[r0:r0 + Bp, c1:c1 + 16]),
                jnp.maximum(y1[r1:r1 + Bp, c0:c0 + 16], y1[r1:r1 + Bp, c1:c1 + 16]))
            k0 = (pi * 3 + pj) * 16
            p2_scr[:, k0:k0 + 16] = m

    # ---- conv2: 2x2, 16->32 on 3x3 -> 2x2 (one matmul) ------------------------
    # output lane layout [(0,0)|(0,1)|(1,0)|(1,1)] x 32ch == conv3 patch order
    y2 = jnp.maximum(mm(p2_scr[...], wA_ref[48:192, :]) + b_ref[1:2, 0:128], 0.0)

    # ---- conv3: 2x2, 32->64 on 2x2 -> 1x1  => image embedding x (Bp, 64) ------
    x = jnp.maximum(mm(y2, wA_ref[192:320, 0:64]) + b_ref[2:3, 0:64], 0.0)

    # ---- LSTMCell: single fused K=128 gate matmul -----------------------------
    h = mem_ref[:, 0:H]
    c = mem_ref[:, H:2 * H]
    xh = jnp.concatenate([x, h], axis=1)                        # (Bp, 128)
    gates = mm(xh, wL_ref[...]) + b_ref[5:6, 0:256]             # (Bp, 256)
    i_g = sigmoid(gates[:, 0:H])            # PyTorch LSTMCell gate order: i,f,g,o
    f_g = sigmoid(gates[:, H:2 * H])
    g_g = jnp.tanh(gates[:, 2 * H:3 * H])
    o_g = sigmoid(gates[:, 3 * H:4 * H])
    c_new = f_g * c + i_g * g_g
    h_new = o_g * jnp.tanh(c_new)
    memout_ref[...] = jnp.concatenate([h_new, c_new], axis=1)   # one full store

    # ---- actor / critic heads (packed, single unmasked output store) ----------
    hid = jnp.tanh(mm(h_new, wA_ref[320:384, :]) + b_ref[3:4, 0:128])   # (Bp,128)
    out2 = mm(hid, wA_ref[384:512, :]) + b_ref[4:5, 0:128]              # (Bp,128)
    lane = lax.broadcasted_iota(jnp.int32, (Bp, 128), 1)
    is_logit = lane < n_act
    masked = jnp.where(is_logit, out2, -jnp.inf)
    mx = jnp.max(masked, axis=-1, keepdims=True)
    lse = jnp.log(jnp.sum(jnp.exp(masked - mx), axis=-1, keepdims=True)) + mx
    # lanes [0:n_act) = log_probs, lane n_act = value, remaining lanes already 0
    misc_ref[...] = jnp.where(is_logit, out2 - lse, out2)


# ---------------------------------------------------------------------------
# Forward wrapper (single pallas_call)
# ---------------------------------------------------------------------------

def ac_forward(params, image, memory, *, n_actions):
    """ACModel.forward (default config).  image: (B,7,7,3) NHWC float32,
    memory: (B,128).  Returns (log_probs, value, new_memory, lstm_embedding)."""
    B = image.shape[0]
    Bp = max(8, ((B + 7) // 8) * 8)           # pad batch to f32 sublane multiple

    # (B,7,7,3) -> (Bp, 160): one lane-dense slab, lane = row*21 + col*3 + chan
    img = image.reshape(B, 7 * 7 * 3).astype(jnp.float32)
    img = jnp.pad(img, ((0, Bp - B), (0, 160 - 147)))
    mem = memory.astype(jnp.float32)
    if Bp != B:
        mem = jnp.pad(mem, ((0, Bp - B), (0, 0)))

    operands = (img, mem, params['wA'], params['wL'], params['bias'])
    kernel = functools.partial(_ac_fused_kernel, n_act=n_actions)

    misc, mem_out = pl.pallas_call(
        kernel,
        grid=(1,),
        in_specs=[pl.BlockSpec(a.shape, lambda i: (0, 0)) for a in operands],
        out_specs=[pl.BlockSpec((Bp, 128), lambda i: (0, 0)),
                   pl.BlockSpec((Bp, 128), lambda i: (0, 0))],
        out_shape=[jax.ShapeDtypeStruct((Bp, 128), jnp.float32),   # [logp|value|0]
                   jax.ShapeDtypeStruct((Bp, 128), jnp.float32)],  # new memory [h|c]
        scratch_shapes=[pltpu.VMEM((6 * Bp, 48), jnp.float32),     # conv1 patches
                        pltpu.VMEM((Bp, 144), jnp.float32)],       # conv2 patches
        input_output_aliases={1: 1},   # memory in -> new_memory out (in-place)
        compiler_params=pltpu.CompilerParams(dimension_semantics=("arbitrary",)),
    )(*operands)

    logp = misc[:B, :n_actions]
    value = misc[:B, n_actions]
    new_memory = mem_out[:B]
    lstm_embedding = new_memory[:, :64]
    return logp, value, new_memory, lstm_embedding


# ---------------------------------------------------------------------------
# Parameter packing (done once, not per call)
# ---------------------------------------------------------------------------

def pack_params(raw, n_actions):
    H = 64
    w1 = np.asarray(raw['w1'], np.float32)   # (2,2,3,16)  HWIO
    w2 = np.asarray(raw['w2'], np.float32)   # (2,2,16,32)
    w3 = np.asarray(raw['w3'], np.float32)   # (2,2,32,64)

    # conv1: im2col "selection in the weight".  Patch row-block i contains image
    # lanes 21i..21i+48; local lane = kh*21 + (j+kw)*3 + ci ; out col = j*16 + co.
    w1_pack = np.zeros((48, 96), np.float32)
    for j in range(6):
        for kh in range(2):
            for kw in range(2):
                r0 = kh * 21 + (j + kw) * 3
                w1_pack[r0:r0 + 3, j * 16:(j + 1) * 16] = w1[kh, kw]

    # conv2: input lane block = pooled position (pi*3+pj)*16, output col block =
    # (oi*2+oj)*32 -> output is already in conv3 patch order.
    w2_pack = np.zeros((144, 128), np.float32)
    for oi in range(2):
        for oj in range(2):
            for kh in range(2):
                for kw in range(2):
                    r0 = ((oi + kh) * 3 + (oj + kw)) * 16
                    c0 = (oi * 2 + oj) * 32
                    w2_pack[r0:r0 + 16, c0:c0 + 32] = w2[kh, kw]

    w3_pack = w3.reshape(128, 64)            # (kh,kw,cin) order == y2 lane order

    # heads: layer1 packed [actor | critic]; layer2 block-diagonal zero-padded to
    # (128,128) so [logits | value | 0] is one lane-dense slab.
    wh1 = np.concatenate([np.asarray(raw['wa1']), np.asarray(raw['wc1'])], axis=1)
    wh2 = np.zeros((128, 128), np.float32)
    wh2[0:64, 0:n_actions] = np.asarray(raw['wa2'])
    wh2[64:128, n_actions:n_actions + 1] = np.asarray(raw['wc2'])

    # one packed weight slab (row offsets all multiples of 8)
    wA = np.zeros((512, 128), np.float32)
    wA[0:48, 0:96] = w1_pack
    wA[48:192, 0:128] = w2_pack
    wA[192:320, 0:64] = w3_pack
    wA[320:384, 0:128] = wh1
    wA[384:512, 0:128] = wh2

    # fused LSTM weight for [x | h]: rows 0:64 input weights, 64:128 hidden
    # weights; columns = gates (i,f,g,o) x 64.
    wx = np.concatenate([np.asarray(raw['wx' + g]) for g in 'ifgo'], axis=1)
    wh = np.concatenate([np.asarray(raw['wh' + g]) for g in 'ifgo'], axis=1)
    wL = np.concatenate([wx, wh], axis=0)                       # (128, 256)

    # one packed bias slab, one sublane row per layer
    bias = np.zeros((8, 256), np.float32)
    bias[0, 0:96] = np.tile(np.asarray(raw['b1']), 6)
    bias[1, 0:128] = np.tile(np.asarray(raw['b2']), 4)
    bias[2, 0:64] = np.asarray(raw['b3'])
    bias[3, 0:64] = np.asarray(raw['ba1'])
    bias[3, 64:128] = np.asarray(raw['bc1'])
    bias[4, 0:n_actions] = np.asarray(raw['ba2'])
    bias[4, n_actions] = np.asarray(raw['bc2'])[0]
    bias[5, 0:256] = np.concatenate([np.asarray(raw['b' + g]) for g in 'ifgo'])

    return {'wA': jnp.asarray(wA), 'wL': jnp.asarray(wL), 'bias': jnp.asarray(bias)}


# ---------------------------------------------------------------------------
# Pure-JAX reference (for correctness check), full f32 precision
# ---------------------------------------------------------------------------

def ac_forward_ref(raw, image, memory):
    dn = ('NHWC', 'HWIO', 'NHWC')
    P = lax.Precision.HIGHEST

    def dot(a, b):
        return jnp.dot(a, b, precision=P)

    def conv_relu(x, w, b):
        y = lax.conv_general_dilated(x, w, (1, 1), 'VALID',
                                     dimension_numbers=dn, precision=P)
        return jnp.maximum(y + b, 0.0)

    y = conv_relu(image, raw['w1'], raw['b1'])
    y = lax.reduce_window(y, -jnp.inf, lax.max, (1, 2, 2, 1), (1, 2, 2, 1), 'VALID')
    y = conv_relu(y, raw['w2'], raw['b2'])
    y = conv_relu(y, raw['w3'], raw['b3'])
    B = image.shape[0]
    x = y.reshape(B, -1)
    H = x.shape[1]
    h, c = memory[:, :H], memory[:, H:]

    sig = lambda z: 1.0 / (1.0 + jnp.exp(-z))
    i_g = sig(dot(x, raw['wxi']) + dot(h, raw['whi']) + raw['bi'])
    f_g = sig(dot(x, raw['wxf']) + dot(h, raw['whf']) + raw['bf'])
    g_g = jnp.tanh(dot(x, raw['wxg']) + dot(h, raw['whg']) + raw['bg'])
    o_g = sig(dot(x, raw['wxo']) + dot(h, raw['who']) + raw['bo'])
    c_new = f_g * c + i_g * g_g
    h_new = o_g * jnp.tanh(c_new)
    emb = h_new

    a1 = jnp.tanh(dot(emb, raw['wa1']) + raw['ba1'])
    logp = jax.nn.log_softmax(dot(a1, raw['wa2']) + raw['ba2'], axis=1)
    c1 = jnp.tanh(dot(emb, raw['wc1']) + raw['bc1'])
    value = dot(c1, raw['wc2'])[:, 0] + raw['bc2'][0]

    return logp, value, jnp.concatenate([h_new, c_new], axis=1), h_new


# ---------------------------------------------------------------------------
# Deterministic synthetic parameters (shapes from ACModel.__init__)
# ---------------------------------------------------------------------------

def init_ac_params(key, n_actions):
    ks = list(jax.random.split(key, 24))
    it = iter(ks)

    def nrm(shape, scale):
        return scale * jax.random.normal(next(it), shape, dtype=jnp.float32)

    H = 64
    p = {}
    p['w1'] = nrm((2, 2, 3, 16), (2 * 2 * 3) ** -0.5)
    p['b1'] = nrm((16,), 0.1)
    p['w2'] = nrm((2, 2, 16, 32), (2 * 2 * 16) ** -0.5)
    p['b2'] = nrm((32,), 0.1)
    p['w3'] = nrm((2, 2, 32, 64), (2 * 2 * 32) ** -0.5)
    p['b3'] = nrm((64,), 0.1)
    # LSTMCell(64, 64), per-gate weights stored (in, out); bias = b_ih + b_hh
    for g in ('i', 'f', 'g', 'o'):
        p['wx' + g] = nrm((H, H), H ** -0.5)
        p['wh' + g] = nrm((H, H), H ** -0.5)
        p['b' + g] = nrm((H,), 0.1)

    # Linear layers follow init_params: N(0,1) rows normalized over fan-in, bias 0
    def linear(n_in, n_out):
        w = jax.random.normal(next(it), (n_out, n_in), dtype=jnp.float32)
        w = w / jnp.sqrt(jnp.sum(w ** 2, axis=1, keepdims=True))
        return w.T, jnp.zeros((n_out,), jnp.float32)

    p['wa1'], p['ba1'] = linear(H, 64)
    p['wa2'], p['ba2'] = linear(64, n_actions)
    p['wc1'], p['bc1'] = linear(H, 64)
    p['wc2'], p['bc2'] = linear(64, 1)
    return p


# ---------------------------------------------------------------------------

if __name__ == "__main__":
    key = jax.random.PRNGKey(0)
    k_img, k_mem, k_par = jax.random.split(key, 3)

    B, n_actions = 2, 7                    # minigrid-style 7x7x3 observation
    image = jax.random.normal(k_img, (B, 7, 7, 3), dtype=jnp.float32)        # obs.image (NHWC)
    memory = 0.1 * jax.random.normal(k_mem, (B, 2 * 64), dtype=jnp.float32)  # (h, c) concatenated

    raw = init_ac_params(k_par, n_actions)
    params = pack_params(raw, n_actions)   # packed once, reused every step

    fwd = jax.jit(ac_forward, static_argnames=("n_actions",))
    logp, value, new_memory, lstm_emb = fwd(params, image, memory, n_actions=n_actions)
    jax.block_until_ready((logp, value, new_memory, lstm_emb))

    # Correctness check against a full-precision pure-JAX reference.  Exact
    # sigmoid + f32 weights allow a tight tolerance (only MXU f32-path rounding
    # and transcendental implementation differences remain).
    r_logp, r_value, r_mem, r_emb = ac_forward_ref(raw, image, memory)
    atol = rtol = 1e-3
    np.testing.assert_allclose(np.asarray(logp), np.asarray(r_logp), atol=atol, rtol=rtol)
    np.testing.assert_allclose(np.asarray(value), np.asarray(r_value), atol=atol, rtol=rtol)
    np.testing.assert_allclose(np.asarray(new_memory), np.asarray(r_mem), atol=atol, rtol=rtol)
    np.testing.assert_allclose(np.asarray(lstm_emb), np.asarray(r_emb), atol=atol, rtol=rtol)

    print("KERNEL_OK")
</pallas_src>

<mosaic_0001>
module attributes {stable_mosaic.version = 11 : i64} {
  func.func @_ac_fused_kernel(%arg0: i32, %arg1: memref<8x160xf32, #tpu.memory_space<vmem>>, %arg2: memref<8x128xf32, #tpu.memory_space<vmem>>, %arg3: memref<512x128xf32, #tpu.memory_space<vmem>>, %arg4: memref<128x256xf32, #tpu.memory_space<vmem>>, %arg5: memref<8x256xf32, #tpu.memory_space<vmem>>, %arg6: memref<8x128xf32, #tpu.memory_space<vmem>>, %arg7: memref<8x128xf32, #tpu.memory_space<vmem>>, %arg8: memref<48x48xf32, #tpu.memory_space<vmem>>, %arg9: memref<8x144xf32, #tpu.memory_space<vmem>>) attributes {dimension_semantics = [#tpu.dimension_semantics<arbitrary>], iteration_bounds = array<i64: 1>, scalar_prefetch = 0 : i64, scratch_operands = 2 : i64, tpu.core_type = #tpu.core_type<tc>, window_params = [{pipeline_mode = #tpu.pipeline_mode<synchronous>, transform_indices = @transform_0, window_bounds = array<i64: 8, 160>}, {pipeline_mode = #tpu.pipeline_mode<synchronous>, transform_indices = @transform_1, window_bounds = array<i64: 8, 128>}, {pipeline_mode = #tpu.pipeline_mode<synchronous>, transform_indices = @transform_2, window_bounds = array<i64: 512, 128>}, {pipeline_mode = #tpu.pipeline_mode<synchronous>, transform_indices = @transform_3, window_bounds = array<i64: 128, 256>}, {pipeline_mode = #tpu.pipeline_mode<synchronous>, transform_indices = @transform_4, window_bounds = array<i64: 8, 256>}, {pipeline_mode = #tpu.pipeline_mode<synchronous>, transform_indices = @transform_5, window_bounds = array<i64: 8, 128>}, {pipeline_mode = #tpu.pipeline_mode<synchronous>, transform_indices = @transform_6, window_bounds = array<i64: 8, 128>}]} {
    %c0 = arith.constant 0 : index
    %c0_0 = arith.constant 0 : index
    %0 = vector.load %arg1[%c0, %c0_0] : memref<8x160xf32, #tpu.memory_space<vmem>>, vector<8x48xf32>
    %c0_1 = arith.constant 0 : index
    %c0_2 = arith.constant 0 : index
    %1 = vector.load %arg8[%c0_1, %c0_2] : memref<48x48xf32, #tpu.memory_space<vmem>>, vector<8x48xf32>
    tpu.vector_store %arg8[%c0_1, %c0_2], %0 {strides = array<i32>} : memref<48x48xf32, #tpu.memory_space<vmem>>, vector<8x48xf32>,
    %c0_3 = arith.constant 0 : index
    %c21 = arith.constant 21 : index
    %2 = vector.load %arg1[%c0_3, %c21] : memref<8x160xf32, #tpu.memory_space<vmem>>, vector<8x48xf32>
    %c8 = arith.constant 8 : index
    %c0_4 = arith.constant 0 : index
    %3 = vector.load %arg8[%c8, %c0_4] : memref<48x48xf32, #tpu.memory_space<vmem>>, vector<8x48xf32>
    tpu.vector_store %arg8[%c8, %c0_4], %2 {strides = array<i32>} : memref<48x48xf32, #tpu.memory_space<vmem>>, vector<8x48xf32>,
    %c0_5 = arith.constant 0 : index
    %c42 = arith.constant 42 : index
    %4 = vector.load %arg1[%c0_5, %c42] : memref<8x160xf32, #tpu.memory_space<vmem>>, vector<8x48xf32>
    %c16 = arith.constant 16 : index
    %c0_6 = arith.constant 0 : index
    %5 = vector.load %arg8[%c16, %c0_6] : memref<48x48xf32, #tpu.memory_space<vmem>>, vector<8x48xf32>
    tpu.vector_store %arg8[%c16, %c0_6], %4 {strides = array<i32>} : memref<48x48xf32, #tpu.memory_space<vmem>>, vector<8x48xf32>,
    %c0_7 = arith.constant 0 : index
    %c63 = arith.constant 63 : index
    %6 = vector.load %arg1[%c0_7, %c63] : memref<8x160xf32, #tpu.memory_space<vmem>>, vector<8x48xf32>
    %c24 = arith.constant 24 : index
    %c0_8 = arith.constant 0 : index
    %7 = vector.load %arg8[%c24, %c0_8] : memref<48x48xf32, #tpu.memory_space<vmem>>, vector<8x48xf32>
    tpu.vector_store %arg8[%c24, %c0_8], %6 {strides = array<i32>} : memref<48x48xf32, #tpu.memory_space<vmem>>, vector<8x48xf32>,
    %c0_9 = arith.constant 0 : index
    %c84 = arith.constant 84 : index
    %8 = vector.load %arg1[%c0_9, %c84] : memref<8x160xf32, #tpu.memory_space<vmem>>, vector<8x48xf32>
    %c32 = arith.constant 32 : index
    %c0_10 = arith.constant 0 : index
    %9 = vector.load %arg8[%c32, %c0_10] : memref<48x48xf32, #tpu.memory_space<vmem>>, vector<8x48xf32>
    tpu.vector_store %arg8[%c32, %c0_10], %8 {strides = array<i32>} : memref<48x48xf32, #tpu.memory_space<vmem>>, vector<8x48xf32>,
    %c0_11 = arith.constant 0 : index
    %c105 = arith.constant 105 : index
    %10 = vector.load %arg1[%c0_11, %c105] : memref<8x160xf32, #tpu.memory_space<vmem>>, vector<8x48xf32>
    %c40 = arith.constant 40 : index
    %c0_12 = arith.constant 0 : index
    %11 = vector.load %arg8[%c40, %c0_12] : memref<48x48xf32, #tpu.memory_space<vmem>>, vector<8x48xf32>
    tpu.vector_store %arg8[%c40, %c0_12], %10 {strides = array<i32>} : memref<48x48xf32, #tpu.memory_space<vmem>>, vector<8x48xf32>,
    %c0_13 = arith.constant 0 : index
    %c0_14 = arith.constant 0 : index
    %12 = vector.load %arg8[%c0_13, %c0_14] : memref<48x48xf32, #tpu.memory_space<vmem>>, vector<48x48xf32>
    %c0_15 = arith.constant 0 : index
    %c0_16 = arith.constant 0 : index
    %13 = vector.load %arg3[%c0_15, %c0_16] : memref<512x128xf32, #tpu.memory_space<vmem>>, vector<48x96xf32>
    %cst = arith.constant dense<0.000000e+00> : vector<48x96xf32>
    %14 = tpu.matmul %12, %13, %cst {dimension_numbers = #tpu.dot_dimension_numbers<[1], [0], [0], [1], [0, 0, 1, 1], [], []>} : vector<48x48xf32>, vector<48x96xf32>, vector<48x96xf32> -> vector<48x96xf32>
    %c0_17 = arith.constant 0 : index
    %c0_18 = arith.constant 0 : index
    %15 = vector.load %arg5[%c0_17, %c0_18] : memref<8x256xf32, #tpu.memory_space<vmem>>, vector<1x96xf32>
    %16 = vector.broadcast %15 : vector<1x96xf32> to vector<48x96xf32>
    %17 = arith.addf %14, %16 : vector<48x96xf32>
    %cst_19 = arith.constant 0.000000e+00 : f32
    %18 = vector.broadcast %cst_19 : f32 to vector<48x96xf32>
    %19 = arith.maximumf %17, %18 : vector<48x96xf32>
    %20 = vector.extract_strided_slice %19 {offsets = [0, 0], sizes = [8, 16], strides = [1, 1]} : vector<48x96xf32> to vector<8x16xf32>
    %21 = vector.extract_strided_slice %19 {offsets = [0, 16], sizes = [8, 16], strides = [1, 1]} : vector<48x96xf32> to vector<8x16xf32>
    %22 = arith.maximumf %20, %21 : vector<8x16xf32>
    %23 = vector.extract_strided_slice %19 {offsets = [8, 0], sizes = [8, 16], strides = [1, 1]} : vector<48x96xf32> to vector<8x16xf32>
    %24 = vector.extract_strided_slice %19 {offsets = [8, 16], sizes = [8, 16], strides = [1, 1]} : vector<48x96xf32> to vector<8x16xf32>
    %25 = arith.maximumf %23, %24 : vector<8x16xf32>
    %26 = arith.maximumf %22, %25 : vector<8x16xf32>
    %c0_20 = arith.constant 0 : index
    %c0_21 = arith.constant 0 : index
    %27 = vector.load %arg9[%c0_20, %c0_21] : memref<8x144xf32, #tpu.memory_space<vmem>>, vector<8x16xf32>
    tpu.vector_store %arg9[%c0_20, %c0_21], %26 {strides = array<i32>} : memref<8x144xf32, #tpu.memory_space<vmem>>, vector<8x16xf32>,
    %28 = vector.extract_strided_slice %19 {offsets = [0, 32], sizes = [8, 16], strides = [1, 1]} : vector<48x96xf32> to vector<8x16xf32>
    %29 = vector.extract_strided_slice %19 {offsets = [0, 48], sizes = [8, 16], strides = [1, 1]} : vector<48x96xf32> to vector<8x16xf32>
    %30 = arith.maximumf %28, %29 : vector<8x16xf32>
    %31 = vector.extract_strided_slice %19 {offsets = [8, 32], sizes = [8, 16], strides = [1, 1]} : vector<48x96xf32> to vector<8x16xf32>
    %32 = vector.extract_strided_slice %19 {offsets = [8, 48], sizes = [8, 16], strides = [1, 1]} : vector<48x96xf32> to vector<8x16xf32>
    %33 = arith.maximumf %31, %32 : vector<8x16xf32>
    %34 = arith.maximumf %30, %33 : vector<8x16xf32>
    %c0_22 = arith.constant 0 : index
    %c16_23 = arith.constant 16 : index
    %35 = vector.load %arg9[%c0_22, %c16_23] : memref<8x144xf32, #tpu.memory_space<vmem>>, vector<8x16xf32>
    tpu.vector_store %arg9[%c0_22, %c16_23], %34 {strides = array<i32>} : memref<8x144xf32, #tpu.memory_space<vmem>>, vector<8x16xf32>,
    %36 = vector.extract_strided_slice %19 {offsets = [0, 64], sizes = [8, 16], strides = [1, 1]} : vector<48x96xf32> to vector<8x16xf32>
    %37 = vector.extract_strided_slice %19 {offsets = [0, 80], sizes = [8, 16], strides = [1, 1]} : vector<48x96xf32> to vector<8x16xf32>
    %38 = arith.maximumf %36, %37 : vector<8x16xf32>
    %39 = vector.extract_strided_slice %19 {offsets = [8, 64], sizes = [8, 16], strides = [1, 1]} : vector<48x96xf32> to vector<8x16xf32>
    %40 = vector.extract_strided_slice %19 {offsets = [8, 80], sizes = [8, 16], strides = [1, 1]} : vector<48x96xf32> to vector<8x16xf32>
    %41 = arith.maximumf %39, %40 : vector<8x16xf32>
    %42 = arith.maximumf %38, %41 : vector<8x16xf32>
    %c0_24 = arith.constant 0 : index
    %c32_25 = arith.constant 32 : index
    %43 = vector.load %arg9[%c0_24, %c32_25] : memref<8x144xf32, #tpu.memory_space<vmem>>, vector<8x16xf32>
    tpu.vector_store %arg9[%c0_24, %c32_25], %42 {strides = array<i32>} : memref<8x144xf32, #tpu.memory_space<vmem>>, vector<8x16xf32>,
    %44 = vector.extract_strided_slice %19 {offsets = [16, 0], sizes = [8, 16], strides = [1, 1]} : vector<48x96xf32> to vector<8x16xf32>
    %45 = vector.extract_strided_slice %19 {offsets = [16, 16], sizes = [8, 16], strides = [1, 1]} : vector<48x96xf32> to vector<8x16xf32>
    %46 = arith.maximumf %44, %45 : vector<8x16xf32>
    %47 = vector.extract_strided_slice %19 {offsets = [24, 0], sizes = [8, 16], strides = [1, 1]} : vector<48x96xf32> to vector<8x16xf32>
    %48 = vector.extract_strided_slice %19 {offsets = [24, 16], sizes = [8, 16], strides = [1, 1]} : vector<48x96xf32> to vector<8x16xf32>
    %49 = arith.maximumf %47, %48 : vector<8x16xf32>
    %50 = arith.maximumf %46, %49 : vector<8x16xf32>
    %c0_26 = arith.constant 0 : index
    %c48 = arith.constant 48 : index
    %51 = vector.load %arg9[%c0_26, %c48] : memref<8x144xf32, #tpu.memory_space<vmem>>, vector<8x16xf32>
    tpu.vector_store %arg9[%c0_26, %c48], %50 {strides = array<i32>} : memref<8x144xf32, #tpu.memory_space<vmem>>, vector<8x16xf32>,
    %52 = vector.extract_strided_slice %19 {offsets = [16, 32], sizes = [8, 16], strides = [1, 1]} : vector<48x96xf32> to vector<8x16xf32>
    %53 = vector.extract_strided_slice %19 {offsets = [16, 48], sizes = [8, 16], strides = [1, 1]} : vector<48x96xf32> to vector<8x16xf32>
    %54 = arith.maximumf %52, %53 : vector<8x16xf32>
    %55 = vector.extract_strided_slice %19 {offsets = [24, 32], sizes = [8, 16], strides = [1, 1]} : vector<48x96xf32> to vector<8x16xf32>
    %56 = vector.extract_strided_slice %19 {offsets = [24, 48], sizes = [8, 16], strides = [1, 1]} : vector<48x96xf32> to vector<8x16xf32>
    %57 = arith.maximumf %55, %56 : vector<8x16xf32>
    %58 = arith.maximumf %54, %57 : vector<8x16xf32>
    %c0_27 = arith.constant 0 : index
    %c64 = arith.constant 64 : index
    %59 = vector.load %arg9[%c0_27, %c64] : memref<8x144xf32, #tpu.memory_space<vmem>>, vector<8x16xf32>
    tpu.vector_store %arg9[%c0_27, %c64], %58 {strides = array<i32>} : memref<8x144xf32, #tpu.memory_space<vmem>>, vector<8x16xf32>,
    %60 = vector.extract_strided_slice %19 {offsets = [16, 64], sizes = [8, 16], strides = [1, 1]} : vector<48x96xf32> to vector<8x16xf32>
    %61 = vector.extract_strided_slice %19 {offsets = [16, 80], sizes = [8, 16], strides = [1, 1]} : vector<48x96xf32> to vector<8x16xf32>
    %62 = arith.maximumf %60, %61 : vector<8x16xf32>
    %63 = vector.extract_strided_slice %19 {offsets = [24, 64], sizes = [8, 16], strides = [1, 1]} : vector<48x96xf32> to vector<8x16xf32>
    %64 = vector.extract_strided_slice %19 {offsets = [24, 80], sizes = [8, 16], strides = [1, 1]} : vector<48x96xf32> to vector<8x16xf32>
    %65 = arith.maximumf %63, %64 : vector<8x16xf32>
    %66 = arith.maximumf %62, %65 : vector<8x16xf32>
    %c0_28 = arith.constant 0 : index
    %c80 = arith.constant 80 : index
    %67 = vector.load %arg9[%c0_28, %c80] : memref<8x144xf32, #tpu.memory_space<vmem>>, vector<8x16xf32>
    tpu.vector_store %arg9[%c0_28, %c80], %66 {strides = array<i32>} : memref<8x144xf32, #tpu.memory_space<vmem>>, vector<8x16xf32>,
    %68 = vector.extract_strided_slice %19 {offsets = [32, 0], sizes = [8, 16], strides = [1, 1]} : vector<48x96xf32> to vector<8x16xf32>
    %69 = vector.extract_strided_slice %19 {offsets = [32, 16], sizes = [8, 16], strides = [1, 1]} : vector<48x96xf32> to vector<8x16xf32>
    %70 = arith.maximumf %68, %69 : vector<8x16xf32>
    %71 = vector.extract_strided_slice %19 {offsets = [40, 0], sizes = [8, 16], strides = [1, 1]} : vector<48x96xf32> to vector<8x16xf32>
    %72 = vector.extract_strided_slice %19 {offsets = [40, 16], sizes = [8, 16], strides = [1, 1]} : vector<48x96xf32> to vector<8x16xf32>
    %73 = arith.maximumf %71, %72 : vector<8x16xf32>
    %74 = arith.maximumf %70, %73 : vector<8x16xf32>
    %c0_29 = arith.constant 0 : index
    %c96 = arith.constant 96 : index
    %75 = vector.load %arg9[%c0_29, %c96] : memref<8x144xf32, #tpu.memory_space<vmem>>, vector<8x16xf32>
    tpu.vector_store %arg9[%c0_29, %c96], %74 {strides = array<i32>} : memref<8x144xf32, #tpu.memory_space<vmem>>, vector<8x16xf32>,
    %76 = vector.extract_strided_slice %19 {offsets = [32, 32], sizes = [8, 16], strides = [1, 1]} : vector<48x96xf32> to vector<8x16xf32>
    %77 = vector.extract_strided_slice %19 {offsets = [32, 48], sizes = [8, 16], strides = [1, 1]} : vector<48x96xf32> to vector<8x16xf32>
    %78 = arith.maximumf %76, %77 : vector<8x16xf32>
    %79 = vector.extract_strided_slice %19 {offsets = [40, 32], sizes = [8, 16], strides = [1, 1]} : vector<48x96xf32> to vector<8x16xf32>
    %80 = vector.extract_strided_slice %19 {offsets = [40, 48], sizes = [8, 16], strides = [1, 1]} : vector<48x96xf32> to vector<8x16xf32>
    %81 = arith.maximumf %79, %80 : vector<8x16xf32>
    %82 = arith.maximumf %78, %81 : vector<8x16xf32>
    %c0_30 = arith.constant 0 : index
    %c112 = arith.constant 112 : index
    %83 = vector.load %arg9[%c0_30, %c112] : memref<8x144xf32, #tpu.memory_space<vmem>>, vector<8x16xf32>
    tpu.vector_store %arg9[%c0_30, %c112], %82 {strides = array<i32>} : memref<8x144xf32, #tpu.memory_space<vmem>>, vector<8x16xf32>,
    %84 = vector.extract_strided_slice %19 {offsets = [32, 64], sizes = [8, 16], strides = [1, 1]} : vector<48x96xf32> to vector<8x16xf32>
    %85 = vector.extract_strided_slice %19 {offsets = [32, 80], sizes = [8, 16], strides = [1, 1]} : vector<48x96xf32> to vector<8x16xf32>
    %86 = arith.maximumf %84, %85 : vector<8x16xf32>
    %87 = vector.extract_strided_slice %19 {offsets = [40, 64], sizes = [8, 16], strides = [1, 1]} : vector<48x96xf32> to vector<8x16xf32>
    %88 = vector.extract_strided_slice %19 {offsets = [40, 80], sizes = [8, 16], strides = [1, 1]} : vector<48x96xf32> to vector<8x16xf32>
    %89 = arith.maximumf %87, %88 : vector<8x16xf32>
    %90 = arith.maximumf %86, %89 : vector<8x16xf32>
    %c0_31 = arith.constant 0 : index
    %c128 = arith.constant 128 : index
    %91 = vector.load %arg9[%c0_31, %c128] : memref<8x144xf32, #tpu.memory_space<vmem>>, vector<8x16xf32>
    tpu.vector_store %arg9[%c0_31, %c128], %90 {strides = array<i32>} : memref<8x144xf32, #tpu.memory_space<vmem>>, vector<8x16xf32>,
    %c0_32 = arith.constant 0 : index
    %c0_33 = arith.constant 0 : index
    %92 = vector.load %arg9[%c0_32, %c0_33] : memref<8x144xf32, #tpu.memory_space<vmem>>, vector<8x144xf32>
    %c48_34 = arith.constant 48 : index
    %c0_35 = arith.constant 0 : index
    %93 = vector.load %arg3[%c48_34, %c0_35] : memref<512x128xf32, #tpu.memory_space<vmem>>, vector<144x128xf32>
    %cst_36 = arith.constant dense<0.000000e+00> : vector<8x128xf32>
    %94 = tpu.matmul %92, %93, %cst_36 {dimension_numbers = #tpu.dot_dimension_numbers<[1], [0], [0], [1], [0, 0, 1, 1], [], []>} : vector<8x144xf32>, vector<144x128xf32>, vector<8x128xf32> -> vector<8x128xf32>
    %c1 = arith.constant 1 : index
    %c0_37 = arith.constant 0 : index
    %95 = vector.load %arg5[%c1, %c0_37] : memref<8x256xf32, #tpu.memory_space<vmem>>, vector<1x128xf32>
    %96 = vector.broadcast %95 : vector<1x128xf32> to vector<8x128xf32>
    %97 = arith.addf %94, %96 : vector<8x128xf32>
    %cst_38 = arith.constant 0.000000e+00 : f32
    %98 = vector.broadcast %cst_38 : f32 to vector<8x128xf32>
    %99 = arith.maximumf %97, %98 : vector<8x128xf32>
    %c192 = arith.constant 192 : index
    %c0_39 = arith.constant 0 : index
    %100 = vector.load %arg3[%c192, %c0_39] : memref<512x128xf32, #tpu.memory_space<vmem>>, vector<128x64xf32>
    %cst_40 = arith.constant dense<0.000000e+00> : vector<8x64xf32>
    %101 = tpu.matmul %99, %100, %cst_40 {dimension_numbers = #tpu.dot_dimension_numbers<[1], [0], [0], [1], [0, 0, 1, 1], [], []>} : vector<8x128xf32>, vector<128x64xf32>, vector<8x64xf32> -> vector<8x64xf32>
    %c2 = arith.constant 2 : index
    %c0_41 = arith.constant 0 : index
    %102 = vector.load %arg5[%c2, %c0_41] : memref<8x256xf32, #tpu.memory_space<vmem>>, vector<1x64xf32>
    %103 = vector.broadcast %102 : vector<1x64xf32> to vector<8x64xf32>
    %104 = arith.addf %101, %103 : vector<8x64xf32>
    %cst_42 = arith.constant 0.000000e+00 : f32
    %105 = vector.broadcast %cst_42 : f32 to vector<8x64xf32>
    %106 = arith.maximumf %104, %105 : vector<8x64xf32>
    %c0_43 = arith.constant 0 : index
    %c0_44 = arith.constant 0 : index
    %107 = vector.load %arg2[%c0_43, %c0_44] : memref<8x128xf32, #tpu.memory_space<vmem>>, vector<8x64xf32>
    %c0_45 = arith.constant 0 : index
    %c64_46 = arith.constant 64 : index
    %108 = vector.load %arg2[%c0_45, %c64_46] : memref<8x128xf32, #tpu.memory_space<vmem>>, vector<8x64xf32>
    %109 = tpu.concatenate %106, %107 in 1 : vector<8x64xf32>, vector<8x64xf32> -> vector<8x128xf32>
    %c0_47 = arith.constant 0 : index
    %c0_48 = arith.constant 0 : index
    %110 = vector.load %arg4[%c0_47, %c0_48] : memref<128x256xf32, #tpu.memory_space<vmem>>, vector<128x256xf32>
    %cst_49 = arith.constant dense<0.000000e+00> : vector<8x256xf32>
    %111 = tpu.matmul %109, %110, %cst_49 {dimension_numbers = #tpu.dot_dimension_numbers<[1], [0], [0], [1], [0, 0, 1, 1], [], []>} : vector<8x128xf32>, vector<128x256xf32>, vector<8x256xf32> -> vector<8x256xf32>
    %c5 = arith.constant 5 : index
    %c0_50 = arith.constant 0 : index
    %112 = vector.load %arg5[%c5, %c0_50] : memref<8x256xf32, #tpu.memory_space<vmem>>, vector<1x256xf32>
    %113 = vector.broadcast %112 : vector<1x256xf32> to vector<8x256xf32>
    %114 = arith.addf %111, %113 : vector<8x256xf32>
    %115 = vector.extract_strided_slice %114 {offsets = [0, 0], sizes = [8, 64], strides = [1, 1]} : vector<8x256xf32> to vector<8x64xf32>
    %cst_51 = arith.constant 5.000000e-01 : f32
    %116 = vector.broadcast %cst_51 : f32 to vector<8x64xf32>
    %117 = arith.mulf %116, %115 : vector<8x64xf32>
    %118 = math.tanh %117 : vector<8x64xf32>
    %cst_52 = arith.constant 5.000000e-01 : f32
    %119 = vector.broadcast %cst_52 : f32 to vector<8x64xf32>
    %120 = arith.mulf %119, %118 : vector<8x64xf32>
    %cst_53 = arith.constant 5.000000e-01 : f32
    %121 = vector.broadcast %cst_53 : f32 to vector<8x64xf32>
    %122 = arith.addf %120, %121 : vector<8x64xf32>
    %123 = vector.extract_strided_slice %114 {offsets = [0, 64], sizes = [8, 64], strides = [1, 1]} : vector<8x256xf32> to vector<8x64xf32>
    %cst_54 = arith.constant 5.000000e-01 : f32
    %124 = vector.broadcast %cst_54 : f32 to vector<8x64xf32>
    %125 = arith.mulf %124, %123 : vector<8x64xf32>
    %126 = math.tanh %125 : vector<8x64xf32>
    %cst_55 = arith.constant 5.000000e-01 : f32
    %127 = vector.broadcast %cst_55 : f32 to vector<8x64xf32>
    %128 = arith.mulf %127, %126 : vector<8x64xf32>
    %cst_56 = arith.constant 5.000000e-01 : f32
    %129 = vector.broadcast %cst_56 : f32 to vector<8x64xf32>
    %130 = arith.addf %128, %129 : vector<8x64xf32>
    %131 = vector.extract_strided_slice %114 {offsets = [0, 128], sizes = [8, 64], strides = [1, 1]} : vector<8x256xf32> to vector<8x64xf32>
    %132 = math.tanh %131 : vector<8x64xf32>
    %133 = vector.extract_strided_slice %114 {offsets = [0, 192], sizes = [8, 64], strides = [1, 1]} : vector<8x256xf32> to vector<8x64xf32>
    %cst_57 = arith.constant 5.000000e-01 : f32
    %134 = vector.broadcast %cst_57 : f32 to vector<8x64xf32>
    %135 = arith.mulf %134, %133 : vector<8x64xf32>
    %136 = math.tanh %135 : vector<8x64xf32>
    %cst_58 = arith.constant 5.000000e-01 : f32
    %137 = vector.broadcast %cst_58 : f32 to vector<8x64xf32>
    %138 = arith.mulf %137, %136 : vector<8x64xf32>
    %cst_59 = arith.constant 5.000000e-01 : f32
    %139 = vector.broadcast %cst_59 : f32 to vector<8x64xf32>
    %140 = arith.addf %138, %139 : vector<8x64xf32>
    %141 = arith.mulf %130, %108 : vector<8x64xf32>
    %142 = arith.mulf %122, %132 : vector<8x64xf32>
    %143 = arith.addf %141, %142 : vector<8x64xf32>
    %144 = math.tanh %143 : vector<8x64xf32>
    %145 = arith.mulf %140, %144 : vector<8x64xf32>
    %146 = tpu.concatenate %145, %143 in 1 : vector<8x64xf32>, vector<8x64xf32> -> vector<8x128xf32>
    %c0_60 = arith.constant 0 : index
    %c0_61 = arith.constant 0 : index
    %147 = vector.load %arg7[%c0_60, %c0_61] : memref<8x128xf32, #tpu.memory_space<vmem>>, vector<8x128xf32>
    tpu.vector_store %arg7[%c0_60, %c0_61], %146 {strides = array<i32>} : memref<8x128xf32, #tpu.memory_space<vmem>>, vector<8x128xf32>,
    %c320 = arith.constant 320 : index
    %c0_62 = arith.constant 0 : index
    %148 = vector.load %arg3[%c320, %c0_62] : memref<512x128xf32, #tpu.memory_space<vmem>>, vector<64x128xf32>
    %cst_63 = arith.constant dense<0.000000e+00> : vector<8x128xf32>
    %149 = tpu.matmul %145, %148, %cst_63 {dimension_numbers = #tpu.dot_dimension_numbers<[1], [0], [0], [1], [0, 0, 1, 1], [], []>} : vector<8x64xf32>, vector<64x128xf32>, vector<8x128xf32> -> vector<8x128xf32>
    %c3 = arith.constant 3 : index
    %c0_64 = arith.constant 0 : index
    %150 = vector.load %arg5[%c3, %c0_64] : memref<8x256xf32, #tpu.memory_space<vmem>>, vector<1x128xf32>
    %151 = vector.broadcast %150 : vector<1x128xf32> to vector<8x128xf32>
    %152 = arith.addf %149, %151 : vector<8x128xf32>
    %153 = math.tanh %152 : vector<8x128xf32>
    %c384 = arith.constant 384 : index
    %c0_65 = arith.constant 0 : index
    %154 = vector.load %arg3[%c384, %c0_65] : memref<512x128xf32, #tpu.memory_space<vmem>>, vector<128x128xf32>
    %cst_66 = arith.constant dense<0.000000e+00> : vector<8x128xf32>
    %155 = tpu.matmul %153, %154, %cst_66 {dimension_numbers = #tpu.dot_dimension_numbers<[1], [0], [0], [1], [0, 0, 1, 1], [], []>} : vector<8x128xf32>, vector<128x128xf32>, vector<8x128xf32> -> vector<8x128xf32>
    %c4 = arith.constant 4 : index
    %c0_67 = arith.constant 0 : index
    %156 = vector.load %arg5[%c4, %c0_67] : memref<8x256xf32, #tpu.memory_space<vmem>>, vector<1x128xf32>
    %157 = vector.broadcast %156 : vector<1x128xf32> to vector<8x128xf32>
    %158 = arith.addf %155, %157 : vector<8x128xf32>
    %159 = tpu.iota {dimensions = array<i32: 1>} : vector<8x128xi32>
    %c7_i32 = arith.constant 7 : i32
    %160 = vector.broadcast %c7_i32 : i32 to vector<8x128xi32>
    %161 = arith.cmpi slt, %159, %160 : vector<8x128xi32>
    %cst_68 = arith.constant 0xFF800000 : f32
    %162 = vector.broadcast %cst_68 : f32 to vector<8x128xf32>
    %163 = arith.select %161, %158, %162 : vector<8x128xi1>, vector<8x128xf32>
    %cst_69 = arith.constant dense<0xFF800000> : vector<8xf32>
    %164 = vector.multi_reduction <maximumf>, %163, %cst_69 [1] : vector<8x128xf32> to vector<8xf32>
    %165 = vector.shape_cast %164 : vector<8xf32> to vector<8x1xf32>
    %166 = vector.broadcast %165 : vector<8x1xf32> to vector<8x128xf32>
    %167 = arith.subf %163, %166 : vector<8x128xf32>
    %168 = math.exp %167 : vector<8x128xf32>
    %cst_70 = arith.constant dense<0.000000e+00> : vector<8xf32>
    %169 = vector.multi_reduction <add>, %168, %cst_70 [1] : vector<8x128xf32> to vector<8xf32>
    %170 = vector.shape_cast %169 : vector<8xf32> to vector<8x1xf32>
    %171 = math.log %170 : vector<8x1xf32>
    %172 = arith.addf %171, %165 : vector<8x1xf32>
    %173 = vector.broadcast %172 : vector<8x1xf32> to vector<8x128xf32>
    %174 = arith.subf %158, %173 : vector<8x128xf32>
    %175 = arith.select %161, %174, %158 : vector<8x128xi1>, vector<8x128xf32>
    %c0_71 = arith.constant 0 : index
    %c0_72 = arith.constant 0 : index
    %176 = vector.load %arg6[%c0_71, %c0_72] : memref<8x128xf32, #tpu.memory_space<vmem>>, vector<8x128xf32>
    tpu.vector_store %arg6[%c0_71, %c0_72], %175 {strides = array<i32>} : memref<8x128xf32, #tpu.memory_space<vmem>>, vector<8x128xf32>,
    return
  }
  func.func @transform_0(%arg0: i32) -> (i32, i32) {
    %c0_i32 = arith.constant 0 : i32
    %c0_i32_0 = arith.constant 0 : i32
    %c0_i32_1 = arith.constant 0 : i32
    return %c0_i32, %c0_i32_0 : i32, i32
  }
  func.func @transform_1(%arg0: i32) -> (i32, i32) {
    %c0_i32 = arith.constant 0 : i32
    %c0_i32_0 = arith.constant 0 : i32
    %c0_i32_1 = arith.constant 0 : i32
    return %c0_i32, %c0_i32_0 : i32, i32
  }
  func.func @transform_2(%arg0: i32) -> (i32, i32) {
    %c0_i32 = arith.constant 0 : i32
    %c0_i32_0 = arith.constant 0 : i32
    %c0_i32_1 = arith.constant 0 : i32
    return %c0_i32, %c0_i32_0 : i32, i32
  }
  func.func @transform_3(%arg0: i32) -> (i32, i32) {
    %c0_i32 = arith.constant 0 : i32
    %c0_i32_0 = arith.constant 0 : i32
    %c0_i32_1 = arith.constant 0 : i32
    return %c0_i32, %c0_i32_0 : i32, i32
  }
  func.func @transform_4(%arg0: i32) -> (i32, i32) {
    %c0_i32 = arith.constant 0 : i32
    %c0_i32_0 = arith.constant 0 : i32
    %c0_i32_1 = arith.constant 0 : i32
    return %c0_i32, %c0_i32_0 : i32, i32
  }
  func.func @transform_5(%arg0: i32) -> (i32, i32) {
    %c0_i32 = arith.constant 0 : i32
    %c0_i32_0 = arith.constant 0 : i32
    %c0_i32_1 = arith.constant 0 : i32
    return %c0_i32, %c0_i32_0 : i32, i32
  }
  func.func @transform_6(%arg0: i32) -> (i32, i32) {
    %c0_i32 = arith.constant 0 : i32
    %c0_i32_0 = arith.constant 0 : i32
    %c0_i32_1 = arith.constant 0 : i32
    return %c0_i32, %c0_i32_0 : i32, i32
  }
}

</mosaic_0001>

<llo_original>
// kernel: ac_forward.1
$region0: #{ac_forward.1}
  #allocation0 [shape = 'u32[]', space=smem, size = 0x4, offset = 0x4, fixed_abs, tag = 'smem constant byte address 0x4 - core index']
  #allocation1 [shape = 'u32[72,128]{1,0:T(1,128)}', space=vmem, size = 0x9000, scoped, tag = 'internal scratch']
  #allocation2 [shape = 'f32[48,48]{1,0:T(8,128)}', space=vmem, size = 0x6000, scoped, tag = 'scratch operand']
  #allocation3 [shape = 'f32[8,144]{1,0:T(8,128)}', space=vmem, size = 0x2000, scoped, tag = 'scratch operand']
  %s0 = inlined_call_operand.vmem [shape: f32[8,160], index: 0, kind: input, shape index: {}]
  %s1 = inlined_call_operand.vmem [shape: f32[8,128], index: 1, kind: input, shape index: {}, may-alias: {1,6}]
  %s2 = inlined_call_operand.hbm [shape: f32[512,128], index: 2, kind: input, shape index: {}]
  %s3 = inlined_call_operand.vmem [shape: f32[128,256], index: 3, kind: input, shape index: {}]
  %s4 = inlined_call_operand.vmem [shape: f32[8,256], index: 4, kind: input, shape index: {}]
  %s5 = inlined_call_operand.vmem [shape: f32[8,128], index: 5, kind: output, shape index: {0}]
  %s6 = inlined_call_operand.vmem [shape: f32[8,128], index: 6, kind: output, shape index: {1}, may-alias: {1,6}]
  %7 = xla_tuple %s5, %s6
  %s8 = sld [smem:[#allocation0]]
  $region42: #{ac_forward.1} parent=0
    _
  %s10 = ssub.s32 1, %s8
  %s11 = scalar_select 0, %s10, %s8
  $region1: #{ac_forward.1} parent=0
    #allocation4 [shape = 'u8[262144]{0}', space=vmem, size = 0x40000, scoped, tag = 'input window, operand 2, single buffered']
    #allocation5 [shape = 's32[1]{0}', space=sflag, size = 0x4, scoped, tag = 'scoped memory for ac_forward.1']
    %12 = vsyncpa [#allocation5], 0
    // Predicated region
    $region2: #{ac_forward.1} parent=1 // pred_check
      _
    $region3: #{ac_forward.1} parent=1 // pred_check_branch
      %14 = sbr.rel (0) target = $region5
    $region4: #{ac_forward.1} parent=1 // pred_region
      _
    $region5: #{ac_forward.1} parent=1 // pred_fallthru
      _
    // Predicated region
    $region6: #{ac_forward.1} parent=1 // pred_check
      _
    $region7: #{ac_forward.1} parent=1 // pred_check_branch
      %16 = sbr.rel (0) target = $region9
    $region8: #{ac_forward.1} parent=1 // pred_region
      _
    $region9: #{ac_forward.1} parent=1 // pred_fallthru
      _
    // Predicated region
    $region10: #{ac_forward.1} parent=1 // pred_check
      _
    $region11: #{ac_forward.1} parent=1 // pred_check_branch
      %18 = sbr.rel (0) target = $region13
    $region12: #{ac_forward.1} parent=1 // pred_region
      %20 = vsyncadd [#allocation5], 0
      %s21 = sshll.u32 %s2, 4
      %s22 = int_to_ptr.hbm [resolvable:$true] %s21
      %s23 = sshll.u32 [#allocation4], 4
      %s24 = int_to_ptr.vmem [resolvable:$true] %s23
      %29 = dma.hbm_to_vmem [thread:$0]  %s22, 8192, %s24, [#allocation5], 128, 128, 8
    $region13: #{ac_forward.1} parent=1 // pred_fallthru
      _
    // Predicated region
    $region14: #{ac_forward.1} parent=1 // pred_check
      _
    $region15: #{ac_forward.1} parent=1 // pred_check_branch
      %31 = sbr.rel (0) target = $region17
    $region16: #{ac_forward.1} parent=1 // pred_region
      _
    $region17: #{ac_forward.1} parent=1 // pred_fallthru
      _
    // Predicated region
    $region18: #{ac_forward.1} parent=1 // pred_check
      _
    $region19: #{ac_forward.1} parent=1 // pred_check_branch
      %33 = sbr.rel (0) target = $region21
    $region20: #{ac_forward.1} parent=1 // pred_region
      _
    $region21: #{ac_forward.1} parent=1 // pred_fallthru
      _
    // Predicated region
    $region22: #{ac_forward.1} parent=1 // pred_check
      _
    $region23: #{ac_forward.1} parent=1 // pred_check_branch
      %35 = sbr.rel (0) target = $region25
    $region24: #{ac_forward.1} parent=1 // pred_region
      %37 = dma.done [#allocation5], 8192
    $region25: #{ac_forward.1} parent=1 // pred_fallthru
      _
    %v38 = vld [vmem:[%s0] sm:$0xff]
    %vm39 = vcmask 392192
    %40 = vst.msk [vmem:[#allocation2] sm:$0xff] %vm39, %v38
    %v41 = vld [vmem:[%s0] sm:$0xff]
    %43 = vrot.lane.b32.xlu0 %v41, 107
    %v44 = vpop.permute.xlu0 %43
    %46 = vst.msk [vmem:[#allocation2 + $0x8] sm:$0xff] %vm39, %v44
    %v47 = vld [vmem:[%s0] sm:$0xff]
    %49 = vrot.lane.b32.xlu0 %v47, 86
    %v50 = vpop.permute.xlu0 %49
    %52 = vst.msk [vmem:[#allocation2 + $0x10] sm:$0xff] %vm39, %v50
    %v53 = vld [vmem:[%s0] sm:$0xff]
    %55 = vrot.lane.b32.xlu0 %v53, 65
    %v56 = vpop.permute.xlu0 %55
    %58 = vst.msk [vmem:[#allocation2 + $0x18] sm:$0xff] %vm39, %v56
    %v59 = vld [vmem:[%s0] sm:$0xff]
    %v60 = vld [vmem:[%s0 + $0x8] sm:$0xff]
    %63 = vrot.lane.b32.xlu0 %v59, 44
    %v64 = vpop.permute.xlu0 %63
    %65 = vrot.lane.b32.xlu0 %v60, 44
    %v66 = vpop.permute.xlu0 %65
    %vm67 = vcmask 359424
    %v68 = vsel %vm67, %v64, %v66
    %70 = vst.msk [vmem:[#allocation2 + $0x20] sm:$0xff] %vm39, %v68
    %v71 = vld [vmem:[%s0] sm:$0xff]
    %v72 = vld [vmem:[%s0 + $0x8] sm:$0xff]
    %75 = vrot.lane.b32.xlu0 %v71, 23
    %v76 = vpop.permute.xlu0 %75
    %77 = vrot.lane.b32.xlu0 %v72, 23
    %v78 = vpop.permute.xlu0 %77
    %vm79 = vcmask 187392
    %v80 = vsel %vm79, %v76, %v78
    %82 = vst.msk [vmem:[#allocation2 + $0x28] sm:$0xff] %vm39, %v80
    %v83 = vld [vmem:[#allocation2] sm:$0xff]
    %v84 = vld [vmem:[#allocation2 + $0x8] sm:$0xff]
    %v85 = vld [vmem:[#allocation2 + $0x10] sm:$0xff]
    %v86 = vld [vmem:[#allocation2 + $0x18] sm:$0xff]
    %v87 = vld [vmem:[#allocation2 + $0x20] sm:$0xff]
    %v88 = vld [vmem:[#allocation2 + $0x28] sm:$0xff]
    %v89 = vld [vmem:[#allocation4] sm:$0xff]
    %v90 = vld [vmem:[#allocation4 + $0x8] sm:$0xff]
    %v91 = vld [vmem:[#allocation4 + $0x10] sm:$0xff]
    %v92 = vld [vmem:[#allocation4 + $0x18] sm:$0xff]
    %v93 = vld [vmem:[#allocation4 + $0x20] sm:$0xff]
    %v94 = vld [vmem:[#allocation4 + $0x28] sm:$0xff]
    %v95 = vld [vmem:[%s4] ss:$0 sm:$0xff]
    %v97 = vsel %vm39, %v83, 0
    %v100 = vsel %vm39, %v84, 0
    %v103 = vsel %vm39, %v85, 0
    %v106 = vsel %vm39, %v86, 0
    %v109 = vsel %vm39, %v87, 0
    %v112 = vsel %vm39, %v88, 0
    %114 = vmatpush.msra.mxu0 0.0
    %115 = vmatpush.msra.mxu0 0.0
    %116 = vmatpush.msra.mxu0 0.0
    %117 = vmatpush.msra.mxu0 0.0
    %118 = vmatpush.msra.mxu0 0.0
    %119 = vmatpush.msra.mxu0 0.0
    %120 = vmatpush.msra.mxu0 0.0
    %121 = vmatpush.msra.mxu0 0.0
    %122 = vmatpush.msra.mxu0 0.0
    %123 = vmatpush.msra.mxu0 0.0
    %124 = vmatpush.msra.mxu0 %v94
    %125 = vmatpush.msra.mxu0 %v93
    %126 = vmatpush.msra.mxu0 %v92
    %127 = vmatpush.msra.mxu0 %v91
    %128 = vmatpush.msra.mxu0 %v90
    %129 = vmatpush.msra.mxu0 %v89
    %130 = vmatmul.f32.gmra.mxu0 %v97
    %v131 = vpop.f32.mrf.mxu0
    %v132 = vadd.f32 %v95, %v131
    %133 = vmatmul.f32.gmra.mxu0 %v100
    %v134 = vpop.f32.mrf.mxu0
    %v135 = vadd.f32 %v95, %v134
    %136 = vmatmul.f32.gmra.mxu0 %v103
    %v137 = vpop.f32.mrf.mxu0
    %v138 = vadd.f32 %v95, %v137
    %139 = vmatmul.f32.gmra.mxu0 %v106
    %v140 = vpop.f32.mrf.mxu0
    %v141 = vadd.f32 %v95, %v140
    %142 = vmatmul.f32.gmra.mxu0 %v109
    %v143 = vpop.f32.mrf.mxu0
    %v144 = vadd.f32 %v95, %v143
    %145 = vmatmul.f32.gmra.mxu0 %v112
    %v146 = vpop.f32.mrf.mxu0
    %v147 = vadd.f32 %v95, %v146
    %148 = vdwg.mxu0
    %v149 = vmax.f32 %v132, 0.0
    %v150 = vmax.f32 %v135, 0.0
    %v151 = vmax.f32 %v138, 0.0
    %v152 = vmax.f32 %v141, 0.0
    %v153 = vmax.f32 %v144, 0.0
    %v154 = vmax.f32 %v147, 0.0
    %156 = vrot.lane.b32.xlu0 %v149, 112
    %v157 = vpop.permute.xlu0 %156
    %v159 = vmax.f32 %v149, %v157
    %161 = vrot.lane.b32.xlu0 %v150, 112
    %v162 = vpop.permute.xlu0 %161
    %v164 = vmax.f32 %v150, %v162
    %v165 = vmax.f32 %v159, %v164
    %vm166 = vcmask 130048
    %167 = vst.msk [vmem:[#allocation3] sm:$0xff] %vm166, %v165
    %169 = vrot.lane.b32.xlu0 %v165, 112
    %v170 = vpop.permute.xlu0 %169
    %vm172 = vcmask 261248
    %173 = vst.msk [vmem:[#allocation3] sm:$0xff] %vm172, %v170
    %174 = vrot.lane.b32.xlu0 %v165, 96
    %v175 = vpop.permute.xlu0 %174
    %vm177 = vcmask 392448
    %178 = vst.msk [vmem:[#allocation3] sm:$0xff] %vm177, %v175
    %180 = vrot.lane.b32.xlu0 %v151, 112
    %v181 = vpop.permute.xlu0 %180
    %v183 = vmax.f32 %v151, %v181
    %185 = vrot.lane.b32.xlu0 %v152, 112
    %v186 = vpop.permute.xlu0 %185
    %v188 = vmax.f32 %v152, %v186
    %v189 = vmax.f32 %v183, %v188
    %191 = vrot.lane.b32.xlu0 %v189, 48
    %v192 = vpop.permute.xlu0 %191
    %vm194 = vcmask 523648
    %195 = vst.msk [vmem:[#allocation3] sm:$0xff] %vm194, %v192
    %196 = vrot.lane.b32.xlu0 %v189, 32
    %v197 = vpop.permute.xlu0 %196
    %vm199 = vcmask 654848
    %200 = vst.msk [vmem:[#allocation3] sm:$0xff] %vm199, %v197
    %201 = vrot.lane.b32.xlu0 %v189, 16
    %v202 = vpop.permute.xlu0 %201
    %vm204 = vcmask 786048
    %205 = vst.msk [vmem:[#allocation3] sm:$0xff] %vm204, %v202
    %207 = vrot.lane.b32.xlu0 %v153, 112
    %v208 = vpop.permute.xlu0 %207
    %v210 = vmax.f32 %v153, %v208
    %212 = vrot.lane.b32.xlu0 %v154, 112
    %v213 = vpop.permute.xlu0 %212
    %v215 = vmax.f32 %v154, %v213
    %v216 = vmax.f32 %v210, %v215
    %218 = vrot.lane.b32.xlu0 %v216, 96
    %v219 = vpop.permute.xlu0 %218
    %vm221 = vcmask 917248
    %222 = vst.msk [vmem:[#allocation3] sm:$0xff] %vm221, %v219
    %223 = vrot.lane.b32.xlu0 %v216, 80
    %v224 = vpop.permute.xlu0 %223
    %vm226 = vcmask 1048448
    %227 = vst.msk [vmem:[#allocation3] sm:$0xff] %vm226, %v224
    %228 = vrot.lane.b32.xlu0 %v216, 64
    %v229 = vpop.permute.xlu0 %228
    %231 = vst.msk [vmem:[#allocation3 + $0x8] sm:$0xff] %vm166, %v229
    %v232 = vld [vmem:[#allocation3] sm:$0xff]
    %v233 = vld [vmem:[#allocation3 + $0x8] sm:$0xff]
    %v234 = vld [vmem:[#allocation4 + $0x30] sm:$0xff]
    %v235 = vld [vmem:[#allocation4 + $0x38] sm:$0xff]
    %v236 = vld [vmem:[#allocation4 + $0x40] sm:$0xff]
    %v237 = vld [vmem:[#allocation4 + $0x48] sm:$0xff]
    %v238 = vld [vmem:[#allocation4 + $0x50] sm:$0xff]
    %v239 = vld [vmem:[#allocation4 + $0x58] sm:$0xff]
    %v240 = vld [vmem:[#allocation4 + $0x60] sm:$0xff]
    %v241 = vld [vmem:[#allocation4 + $0x68] sm:$0xff]
    %v242 = vld [vmem:[#allocation4 + $0x70] sm:$0xff]
    %v243 = vld [vmem:[#allocation4 + $0x78] sm:$0xff]
    %v244 = vld [vmem:[#allocation4 + $0x80] sm:$0xff]
    %v245 = vld [vmem:[#allocation4 + $0x88] sm:$0xff]
    %v246 = vld [vmem:[#allocation4 + $0x90] sm:$0xff]
    %v247 = vld [vmem:[#allocation4 + $0x98] sm:$0xff]
    %v248 = vld [vmem:[#allocation4 + $0xa0] sm:$0xff]
    %v249 = vld [vmem:[#allocation4 + $0xa8] sm:$0xff]
    %v250 = vld [vmem:[#allocation4 + $0xb0] sm:$0xff]
    %v251 = vld [vmem:[#allocation4 + $0xb8] sm:$0xff]
    %v252 = vld [vmem:[%s4 + $0x1] ss:$0 sm:$0xff]
    %v254 = vsel %vm166, %v233, 0
    %256 = vmatpush.msra.mxu0 %v249
    %257 = vmatpush.msra.mxu0 %v248
    %258 = vmatpush.msra.mxu0 %v247
    %259 = vmatpush.msra.mxu0 %v246
    %260 = vmatpush.msra.mxu0 %v245
    %261 = vmatpush.msra.mxu0 %v244
    %262 = vmatpush.msra.mxu0 %v243
    %263 = vmatpush.msra.mxu0 %v242
    %264 = vmatpush.msra.mxu0 %v241
    %265 = vmatpush.msra.mxu0 %v240
    %266 = vmatpush.msra.mxu0 %v239
    %267 = vmatpush.msra.mxu0 %v238
    %268 = vmatpush.msra.mxu0 %v237
    %269 = vmatpush.msra.mxu0 %v236
    %270 = vmatpush.msra.mxu0 %v235
    %271 = vmatpush.msra.mxu0 %v234
    %272 = vmatmul.f32.gmra.mxu0 %v232
    %v273 = vpop.f32.mrf.mxu0
    %v274 = vadd.f32 %v252, %v273
    %275 = vdwg.mxu0
    %276 = vmatpush.msra.mxu0 0.0
    %277 = vmatpush.msra.mxu0 0.0
    %278 = vmatpush.msra.mxu0 0.0
    %279 = vmatpush.msra.mxu0 0.0
    %280 = vmatpush.msra.mxu0 0.0
    %281 = vmatpush.msra.mxu0 0.0
    %282 = vmatpush.msra.mxu0 0.0
    %283 = vmatpush.msra.mxu0 0.0
    %284 = vmatpush.msra.mxu0 0.0
    %285 = vmatpush.msra.mxu0 0.0
    %286 = vmatpush.msra.mxu0 0.0
    %287 = vmatpush.msra.mxu0 0.0
    %288 = vmatpush.msra.mxu0 0.0
    %289 = vmatpush.msra.mxu0 0.0
    %290 = vmatpush.msra.mxu0 %v251
    %291 = vmatpush.msra.mxu0 %v250
    %292 = vmatmul.f32.gmra.mxu0 %v254
    %v293 = vpop.f32.mrf.mxu0
    %v294 = vadd.f32 %v274, %v293
    %295 = vdwg.mxu0
    %v296 = vmax.f32 %v294, 0.0
    %v297 = vld [vmem:[#allocation4 + $0xc0] sm:$0xff]
    %v298 = vld [vmem:[#allocation4 + $0xc8] sm:$0xff]
    %v299 = vld [vmem:[#allocation4 + $0xd0] sm:$0xff]
    %v300 = vld [vmem:[#allocation4 + $0xd8] sm:$0xff]
    %v301 = vld [vmem:[#allocation4 + $0xe0] sm:$0xff]
    %v302 = vld [vmem:[#allocation4 + $0xe8] sm:$0xff]
    %v303 = vld [vmem:[#allocation4 + $0xf0] sm:$0xff]
    %v304 = vld [vmem:[#allocation4 + $0xf8] sm:$0xff]
    %v305 = vld [vmem:[#allocation4 + $0x100] sm:$0xff]
    %v306 = vld [vmem:[#allocation4 + $0x108] sm:$0xff]
    %v307 = vld [vmem:[#allocation4 + $0x110] sm:$0xff]
    %v308 = vld [vmem:[#allocation4 + $0x118] sm:$0xff]
    %v309 = vld [vmem:[#allocation4 + $0x120] sm:$0xff]
    %v310 = vld [vmem:[#allocation4 + $0x128] sm:$0xff]
    %v311 = vld [vmem:[#allocation4 + $0x130] sm:$0xff]
    %v312 = vld [vmem:[#allocation4 + $0x138] sm:$0xff]
    %v313 = vld [vmem:[%s4 + $0x2] ss:$0 sm:$0xff]
    %314 = vmatpush.msra.mxu0 %v312
    %315 = vmatpush.msra.mxu0 %v311
    %316 = vmatpush.msra.mxu0 %v310
    %317 = vmatpush.msra.mxu0 %v309
    %318 = vmatpush.msra.mxu0 %v308
    %319 = vmatpush.msra.mxu0 %v307
    %320 = vmatpush.msra.mxu0 %v306
    %321 = vmatpush.msra.mxu0 %v305
    %322 = vmatpush.msra.mxu0 %v304
    %323 = vmatpush.msra.mxu0 %v303
    %324 = vmatpush.msra.mxu0 %v302
    %325 = vmatpush.msra.mxu0 %v301
    %326 = vmatpush.msra.mxu0 %v300
    %327 = vmatpush.msra.mxu0 %v299
    %328 = vmatpush.msra.mxu0 %v298
    %329 = vmatpush.msra.mxu0 %v297
    %330 = vmatmul.f32.gmra.mxu0 %v296
    %v331 = vpop.f32.mrf.mxu0
    %v332 = vadd.f32 %v313, %v331
    %333 = vdwg.mxu0
    %v334 = vmax.f32 %v332, 0.0
    %v335 = vld [vmem:[%s1] sm:$0xff]
    %337 = vrot.lane.b32.xlu0 %v335, 64
    %v338 = vpop.permute.xlu0 %337
    %vm340 = vcmask 523264
    %v341 = vsel %vm340, %v334, %v338
    %v342 = vld [vmem:[%s3] sm:$0xff]
    %v343 = vld [vmem:[%s3 + $0x8] sm:$0xff]
    %v344 = vld [vmem:[%s3 + $0x10] sm:$0xff]
    %v345 = vld [vmem:[%s3 + $0x18] sm:$0xff]
    %v346 = vld [vmem:[%s3 + $0x20] sm:$0xff]
    %v347 = vld [vmem:[%s3 + $0x28] sm:$0xff]
    %v348 = vld [vmem:[%s3 + $0x30] sm:$0xff]
    %v349 = vld [vmem:[%s3 + $0x38] sm:$0xff]
    %v350 = vld [vmem:[%s3 + $0x40] sm:$0xff]
    %v351 = vld [vmem:[%s3 + $0x48] sm:$0xff]
    %v352 = vld [vmem:[%s3 + $0x50] sm:$0xff]
    %v353 = vld [vmem:[%s3 + $0x58] sm:$0xff]
    %v354 = vld [vmem:[%s3 + $0x60] sm:$0xff]
    %v355 = vld [vmem:[%s3 + $0x68] sm:$0xff]
    %v356 = vld [vmem:[%s3 + $0x70] sm:$0xff]
    %v357 = vld [vmem:[%s3 + $0x78] sm:$0xff]
    %v358 = vld [vmem:[%s3 + $0x80] sm:$0xff]
    %v359 = vld [vmem:[%s3 + $0x88] sm:$0xff]
    %v360 = vld [vmem:[%s3 + $0x90] sm:$0xff]
    %v361 = vld [vmem:[%s3 + $0x98] sm:$0xff]
    %v362 = vld [vmem:[%s3 + $0xa0] sm:$0xff]
    %v363 = vld [vmem:[%s3 + $0xa8] sm:$0xff]
    %v364 = vld [vmem:[%s3 + $0xb0] sm:$0xff]
    %v365 = vld [vmem:[%s3 + $0xb8] sm:$0xff]
    %v366 = vld [vmem:[%s3 + $0xc0] sm:$0xff]
    %v367 = vld [vmem:[%s3 + $0xc8] sm:$0xff]
    %v368 = vld [vmem:[%s3 + $0xd0] sm:$0xff]
    %v369 = vld [vmem:[%s3 + $0xd8] sm:$0xff]
    %v370 = vld [vmem:[%s3 + $0xe0] sm:$0xff]
    %v371 = vld [vmem:[%s3 + $0xe8] sm:$0xff]
    %v372 = vld [vmem:[%s3 + $0xf0] sm:$0xff]
    %v373 = vld [vmem:[%s3 + $0xf8] sm:$0xff]
    %s374 = scalar_lea.vmem %s4, 5
    %v375 = vld [vmem:[%s374] ss:$8 sm:$0x3]
    %v377 = vperm.slane %v375, 0
    %v378 = vperm.slane %v375, 1
    %381 = vmatpush.msra.mxu0 %v372
    %382 = vmatpush.msra.mxu0 %v370
    %383 = vmatpush.msra.mxu0 %v368
    %384 = vmatpush.msra.mxu0 %v366
    %385 = vmatpush.msra.mxu0 %v364
    %386 = vmatpush.msra.mxu0 %v362
    %387 = vmatpush.msra.mxu0 %v360
    %388 = vmatpush.msra.mxu0 %v358
    %389 = vmatpush.msra.mxu0 %v356
    %390 = vmatpush.msra.mxu0 %v354
    %391 = vmatpush.msra.mxu0 %v352
    %392 = vmatpush.msra.mxu0 %v350
    %393 = vmatpush.msra.mxu0 %v348
    %394 = vmatpush.msra.mxu0 %v346
    %395 = vmatpush.msra.mxu0 %v344
    %396 = vmatpush.msra.mxu0 %v342
    %397 = vmatmul.f32.gmra.mxu0 %v341
    %v398 = vpop.f32.mrf.mxu0
    %v399 = vadd.f32 %v377, %v398
    %400 = vdwg.mxu0
    %401 = vmatpush.msra.mxu0 %v373
    %402 = vmatpush.msra.mxu0 %v371
    %403 = vmatpush.msra.mxu0 %v369
    %404 = vmatpush.msra.mxu0 %v367
    %405 = vmatpush.msra.mxu0 %v365
    %406 = vmatpush.msra.mxu0 %v363
    %407 = vmatpush.msra.mxu0 %v361
    %408 = vmatpush.msra.mxu0 %v359
    %409 = vmatpush.msra.mxu0 %v357
    %410 = vmatpush.msra.mxu0 %v355
    %411 = vmatpush.msra.mxu0 %v353
    %412 = vmatpush.msra.mxu0 %v351
    %413 = vmatpush.msra.mxu0 %v349
    %414 = vmatpush.msra.mxu0 %v347
    %415 = vmatpush.msra.mxu0 %v345
    %416 = vmatpush.msra.mxu0 %v343
    %417 = vmatmul.f32.gmra.mxu0 %v341
    %v418 = vpop.f32.mrf.mxu0
    %v419 = vadd.f32 %v378, %v418
    %420 = vdwg.mxu0
    %v421 = vmul.f32 %v399, 0.5
    %v422 = vtanh.pop %v421
    %v423 = vmul.f32 %v422, 0.5
    %v424 = vadd.f32 %v423, 0.5
    %v425 = vtanh.pop %v419
    %v426 = vmul.f32 %v419, 0.5
    %v427 = vtanh.pop %v426
    %v428 = vmul.f32 %v427, 0.5
    %v429 = vadd.f32 %v428, 0.5
    %v430 = vmul.f32 %v424, %v335
    %v431 = vmul.f32 %v424, %v425
    %433 = vrot.lane.b32.xlu0 %v431, 64
    %v434 = vpop.permute.xlu0 %433
    %v436 = vadd.f32 %v430, %v434
    %v437 = vtanh.pop %v436
    %v438 = vmul.f32 %v429, %v437
    %440 = vrot.lane.b32.xlu0 %v438, 64
    %v441 = vpop.permute.xlu0 %440
    %v443 = vsel %vm340, %v441, %v436
    %444 = vst [vmem:[%s6] sm:$0xff] %v443
    %v445 = vld [vmem:[#allocation4 + $0x140] sm:$0xff]
    %v446 = vld [vmem:[#allocation4 + $0x148] sm:$0xff]
    %v447 = vld [vmem:[#allocation4 + $0x150] sm:$0xff]
    %v448 = vld [vmem:[#allocation4 + $0x158] sm:$0xff]
    %v449 = vld [vmem:[#allocation4 + $0x160] sm:$0xff]
    %v450 = vld [vmem:[#allocation4 + $0x168] sm:$0xff]
    %v451 = vld [vmem:[#allocation4 + $0x170] sm:$0xff]
    %v452 = vld [vmem:[#allocation4 + $0x178] sm:$0xff]
    %v453 = vld [vmem:[%s4 + $0x3] ss:$0 sm:$0xff]
    %v454 = vsel %vm340, %v441, 0
    %456 = vmatpush.msra.mxu0 0.0
    %457 = vmatpush.msra.mxu0 0.0
    %458 = vmatpush.msra.mxu0 0.0
    %459 = vmatpush.msra.mxu0 0.0
    %460 = vmatpush.msra.mxu0 0.0
    %461 = vmatpush.msra.mxu0 0.0
    %462 = vmatpush.msra.mxu0 0.0
    %463 = vmatpush.msra.mxu0 0.0
    %464 = vmatpush.msra.mxu0 %v452
    %465 = vmatpush.msra.mxu0 %v451
    %466 = vmatpush.msra.mxu0 %v450
    %467 = vmatpush.msra.mxu0 %v449
    %468 = vmatpush.msra.mxu0 %v448
    %469 = vmatpush.msra.mxu0 %v447
    %470 = vmatpush.msra.mxu0 %v446
    %471 = vmatpush.msra.mxu0 %v445
    %472 = vmatmul.f32.gmra.mxu0 %v454
    %v473 = vpop.f32.mrf.mxu0
    %v474 = vadd.f32 %v453, %v473
    %475 = vdwg.mxu0
    %v476 = vtanh.pop %v474
    %v477 = vld [vmem:[#allocation4 + $0x180] sm:$0xff]
    %v478 = vld [vmem:[#allocation4 + $0x188] sm:$0xff]
    %v479 = vld [vmem:[#allocation4 + $0x190] sm:$0xff]
    %v480 = vld [vmem:[#allocation4 + $0x198] sm:$0xff]
    %v481 = vld [vmem:[#allocation4 + $0x1a0] sm:$0xff]
    %v482 = vld [vmem:[#allocation4 + $0x1a8] sm:$0xff]
    %v483 = vld [vmem:[#allocation4 + $0x1b0] sm:$0xff]
    %v484 = vld [vmem:[#allocation4 + $0x1b8] sm:$0xff]
    %v485 = vld [vmem:[#allocation4 + $0x1c0] sm:$0xff]
    %v486 = vld [vmem:[#allocation4 + $0x1c8] sm:$0xff]
    %v487 = vld [vmem:[#allocation4 + $0x1d0] sm:$0xff]
    %v488 = vld [vmem:[#allocation4 + $0x1d8] sm:$0xff]
    %v489 = vld [vmem:[#allocation4 + $0x1e0] sm:$0xff]
    %v490 = vld [vmem:[#allocation4 + $0x1e8] sm:$0xff]
    %v491 = vld [vmem:[#allocation4 + $0x1f0] sm:$0xff]
    %v492 = vld [vmem:[#allocation4 + $0x1f8] sm:$0xff]
    %v493 = vld [vmem:[%s4 + $0x4] ss:$0 sm:$0xff]
    %494 = vmatpush.msra.mxu0 %v492
    %495 = vmatpush.msra.mxu0 %v491
    %496 = vmatpush.msra.mxu0 %v490
    %497 = vmatpush.msra.mxu0 %v489
    %498 = vmatpush.msra.mxu0 %v488
    %499 = vmatpush.msra.mxu0 %v487
    %500 = vmatpush.msra.mxu0 %v486
    %501 = vmatpush.msra.mxu0 %v485
    %502 = vmatpush.msra.mxu0 %v484
    %503 = vmatpush.msra.mxu0 %v483
    %504 = vmatpush.msra.mxu0 %v482
    %505 = vmatpush.msra.mxu0 %v481
    %506 = vmatpush.msra.mxu0 %v480
    %507 = vmatpush.msra.mxu0 %v479
    %508 = vmatpush.msra.mxu0 %v478
    %509 = vmatpush.msra.mxu0 %v477
    %510 = vmatmul.f32.gmra.mxu0 %v476
    %v511 = vpop.f32.mrf.mxu0
    %v512 = vadd.f32 %v493, %v511
    %513 = vdwg.mxu0
    %v514 = vlaneseq
    %v515 = vand.u32 %v514, 127
    %vm516 = vcmp.lt.s32.totalorder %v515, 7
    %v517 = vsel %vm516, %v512, -inf
    %518 = vmax.xlane.f32.xlu0 %v517
    %v519 = vpop.xlane.xlu0 %518
    %v520 = vsub.f32 %v517, %v519
    %v521 = vmul.f32 %v520, 1.442695
    %v522 = vpow.pop %v521
    %523 = vadd.xlane.f32.xlu0 %v522
    %v524 = vpop.xlane.xlu0 %523
    %v525 = vlog2.pop %v524
    %v526 = vmul.f32 %v525, 0.6931472
    %v527 = vadd.f32 %v526, %v519
    %v528 = vsub.f32 %v512, %v527
    %v529 = vsel %vm516, %v528, %v512
    %530 = vst [vmem:[%s5] sm:$0xff] %v529
    // Predicated region
    $region26: #{ac_forward.1} parent=1 // pred_check
      _
    $region27: #{ac_forward.1} parent=1 // pred_check_branch
      %532 = sbr.rel (0) target = $region29
    $region28: #{ac_forward.1} parent=1 // pred_region
      _
    $region29: #{ac_forward.1} parent=1 // pred_fallthru
      _
    // Predicated region
    $region30: #{ac_forward.1} parent=1 // pred_check
      _
    $region31: #{ac_forward.1} parent=1 // pred_check_branch
      %534 = sbr.rel (0) target = $region33
    $region32: #{ac_forward.1} parent=1 // pred_region
      _
    $region33: #{ac_forward.1} parent=1 // pred_fallthru
      _
    // Predicated region
    $region34: #{ac_forward.1} parent=1 // pred_check
      _
    $region35: #{ac_forward.1} parent=1 // pred_check_branch
      %536 = sbr.rel (0) target = $region37
    $region36: #{ac_forward.1} parent=1 // pred_region
      _
    $region37: #{ac_forward.1} parent=1 // pred_fallthru
      _
    // Predicated region
    $region38: #{ac_forward.1} parent=1 // pred_check
      _
    $region39: #{ac_forward.1} parent=1 // pred_check_branch
      %538 = sbr.rel (0) target = $region41
    $region40: #{ac_forward.1} parent=1 // pred_region
      _
    $region41: #{ac_forward.1} parent=1 // pred_fallthru
      _
    %539 = vsyncpa [#allocation5], 1

</llo_original>
